<compile_context>
chip_gen: v7x
topology: tpu7x:2x2x1
jax: 0.10.0
libtpu: 0.0.40
codegen_flags: <defaults>
</compile_context>

<pallas_src>
import functools

import jax
import jax.numpy as jnp
from jax.experimental import pallas as pl
from jax.experimental.pallas import tpu as pltpu


def _round_up(x, m):
    return ((x + m - 1) // m) * m


# ----------------------------------------------------------------------------
# Fused kernel: dense -> (+bias) -> residual add -> LayerNorm.
# One grid step processes a (TM, I) row-tile.
# ----------------------------------------------------------------------------
def _bert_output_kernel(x_ref, res_ref, w_ref, p_ref, out_ref, *, eps):
    # bf16 x bf16 -> f32 accumulation on the MXU.
    h = jnp.dot(x_ref[...], w_ref[...], preferred_element_type=jnp.float32)

    bias = p_ref[0:1, :]           # (1, H) f32
    gamma = p_ref[1:2, :]          # (1, H) f32
    beta = p_ref[2:3, :]           # (1, H) f32

    h = h + bias
    # dropout == identity at inference
    h = h + res_ref[...].astype(jnp.float32)          # residual add (f32)

    mean = jnp.mean(h, axis=-1, keepdims=True)
    var = jnp.mean(jnp.square(h - mean), axis=-1, keepdims=True)
    h = (h - mean) * jax.lax.rsqrt(var + eps)
    out_ref[...] = (h * gamma + beta).astype(out_ref.dtype)


def bert_output_forward(hidden_states, input_tensor, params, *, tm=512):
    """hidden_states: (B, S, I); input_tensor: (B, S, H) -> (B, S, H)."""
    B, S, I = hidden_states.shape
    H = input_tensor.shape[-1]
    M = B * S

    out_dtype = hidden_states.dtype          # follow caller's activation dtype

    # Stream activations / residual as bf16 (no-op if caller already has bf16).
    x2d = hidden_states.reshape(M, I)
    r2d = input_tensor.reshape(M, H)
    if x2d.dtype != jnp.bfloat16:
        x2d = x2d.astype(jnp.bfloat16)
    if r2d.dtype != jnp.bfloat16:
        r2d = r2d.astype(jnp.bfloat16)

    # Weight should already be bf16 at parameter-load time; cast only if not.
    w = params["w"]
    if w.dtype != jnp.bfloat16:
        w = w.astype(jnp.bfloat16)                               # (I, H)

    # Pack bias / gamma / beta into a single (3, H) f32 operand.
    pvec = jnp.stack(
        [params["b"], params["ln_gamma"], params["ln_beta"]]
    ).astype(jnp.float32)                                        # (3, H)

    eps = float(params["layer_norm_eps"])

    # Row tile: multiple of 8 (sublane), capped so the grid has >= 2 steps
    # where possible (v7x megacore sharding), and never silly-large vs M.
    tm = max(8, _round_up(min(tm, M), 8))
    tm_cap = max(8, _round_up(pl.cdiv(M, 2), 8))
    tm = min(tm, tm_cap)
    grid = (pl.cdiv(M, tm),)

    out_bytes = jnp.dtype(out_dtype).itemsize
    # VMEM budget: double-buffered x / residual / out tiles + single-buffered
    # weight + packed LN params (sublane-padded), plus headroom.
    vmem_bytes = (2 * tm * I * 2
                  + 2 * tm * H * 2
                  + 2 * tm * H * out_bytes
                  + 1 * I * H * 2
                  + 8 * H * 4)
    vmem_limit = min(int(vmem_bytes * 1.25) + (2 << 20), 64 * 1024 * 1024)

    kernel = functools.partial(_bert_output_kernel, eps=eps)

    out2d = pl.pallas_call(
        kernel,
        out_shape=jax.ShapeDtypeStruct((M, H), out_dtype),
        grid_spec=pltpu.PrefetchScalarGridSpec(
            num_scalar_prefetch=0,
            grid=grid,
            in_specs=[
                pl.BlockSpec((tm, I), lambda i: (i, 0)),          # x row-tile
                pl.BlockSpec((tm, H), lambda i: (i, 0)),          # residual
                pl.BlockSpec((I, H), lambda i: (0, 0),
                             pipeline_mode=pl.Buffered(1)),       # weight
                pl.BlockSpec((3, H), lambda i: (0, 0),
                             pipeline_mode=pl.Buffered(1)),       # b/gamma/beta
            ],
            out_specs=pl.BlockSpec((tm, H), lambda i: (i, 0)),
        ),
        compiler_params=pltpu.CompilerParams(
            dimension_semantics=("parallel",),
            vmem_limit_bytes=vmem_limit,
        ),
        cost_estimate=pl.CostEstimate(
            flops=2 * M * I * H,
            transcendentals=M,                       # one rsqrt per row
            bytes_accessed=(M * I * 2 + M * H * 2 + I * H * 2
                            + 3 * H * 4 + M * H * out_bytes),
        ),
    )(x2d, r2d, w, pvec)

    return out2d.reshape(B, S, H)


# ----------------------------------------------------------------------------
# Pure-JAX reference (f32) for a sanity check.
# ----------------------------------------------------------------------------
def _reference(hidden_states, input_tensor, params):
    h = hidden_states.astype(jnp.float32) @ params["w"].astype(jnp.float32)
    h = h + params["b"].astype(jnp.float32)
    h = h + input_tensor.astype(jnp.float32)             # dropout = identity
    mu = jnp.mean(h, axis=-1, keepdims=True)
    var = jnp.mean(jnp.square(h - mu), axis=-1, keepdims=True)
    h = (h - mu) * jax.lax.rsqrt(var + params["layer_norm_eps"])
    return h * params["ln_gamma"].astype(jnp.float32) + params["ln_beta"].astype(jnp.float32)


if __name__ == "__main__":
    # Small synthetic config: batch=2, seq=12, hidden=128, intermediate=512.
    # M = 24 rows; the tm cap yields tm=16 -> 2 grid steps, and the second
    # step is a ragged tile (rows 16..23 valid of a 16-row block covering
    # 16..31), exercising the masked out-of-bounds store path.
    B, S, H, I = 2, 12, 128, 512
    key = jax.random.PRNGKey(0)
    k = jax.random.split(key, 4)

    params = {
        # Weight pre-cast to bf16 at "load time" (stored transposed: (I, H)).
        "w": (jax.random.normal(k[0], (I, H), jnp.float32) * 0.02).astype(jnp.bfloat16),
        "b": jax.random.normal(k[1], (H,), jnp.float32) * 0.02,
        "ln_gamma": jnp.ones((H,), jnp.float32),
        "ln_beta": jnp.zeros((H,), jnp.float32),
        "layer_norm_eps": 1e-12,
    }

    hidden_states = jax.random.normal(k[2], (B, S, I), jnp.bfloat16)
    input_tensor = jax.random.normal(k[3], (B, S, H), jnp.bfloat16)

    out = bert_output_forward(hidden_states, input_tensor, params)
    out = jax.block_until_ready(out)

    ref = _reference(hidden_states, input_tensor, params)
    assert out.shape == (B, S, H)
    assert out.dtype == hidden_states.dtype
    # bf16 streamed operands / bf16 output vs f32 reference -> loose tolerance.
    assert jnp.allclose(out.astype(jnp.float32), ref, atol=5e-2, rtol=5e-2), \
        "mismatch vs reference"

    print("KERNEL_OK")
</pallas_src>

<mosaic_0001>
module attributes {stable_mosaic.version = 11 : i64} {
  func.func @_bert_output_kernel(%arg0: i32, %arg1: memref<16x512xbf16, #tpu.memory_space<vmem>>, %arg2: memref<16x128xbf16, #tpu.memory_space<vmem>>, %arg3: memref<512x128xbf16, #tpu.memory_space<vmem>>, %arg4: memref<3x128xf32, #tpu.memory_space<vmem>>, %arg5: memref<16x128xbf16, #tpu.memory_space<vmem>>) attributes {dimension_semantics = [#tpu.dimension_semantics<parallel>], iteration_bounds = array<i64: 2>, scalar_prefetch = 0 : i64, scratch_operands = 0 : i64, tpu.core_type = #tpu.core_type<tc>, window_params = [{transform_indices = @transform_0, window_bounds = array<i64: 16, 512>}, {transform_indices = @transform_1, window_bounds = array<i64: 16, 128>}, {pipeline_mode = #tpu.pipeline_mode<synchronous>, transform_indices = @transform_2, window_bounds = array<i64: 512, 128>}, {pipeline_mode = #tpu.pipeline_mode<synchronous>, transform_indices = @transform_3, window_bounds = array<i64: 3, 128>}, {transform_indices = @transform_4, window_bounds = array<i64: 16, 128>}]} {
    %c0 = arith.constant 0 : index
    %c0_0 = arith.constant 0 : index
    %0 = vector.load %arg1[%c0, %c0_0] : memref<16x512xbf16, #tpu.memory_space<vmem>>, vector<16x512xbf16>
    %c0_1 = arith.constant 0 : index
    %c0_2 = arith.constant 0 : index
    %1 = vector.load %arg3[%c0_1, %c0_2] : memref<512x128xbf16, #tpu.memory_space<vmem>>, vector<512x128xbf16>
    %cst = arith.constant dense<0.000000e+00> : vector<16x128xf32>
    %2 = tpu.matmul %0, %1, %cst {dimension_numbers = #tpu.dot_dimension_numbers<[1], [0], [0], [1], [0, 0, 1, 1], [], []>} : vector<16x512xbf16>, vector<512x128xbf16>, vector<16x128xf32> -> vector<16x128xf32>
    %c0_3 = arith.constant 0 : index
    %c0_4 = arith.constant 0 : index
    %3 = vector.load %arg4[%c0_3, %c0_4] : memref<3x128xf32, #tpu.memory_space<vmem>>, vector<1x128xf32>
    %c1 = arith.constant 1 : index
    %c0_5 = arith.constant 0 : index
    %4 = vector.load %arg4[%c1, %c0_5] : memref<3x128xf32, #tpu.memory_space<vmem>>, vector<1x128xf32>
    %c2 = arith.constant 2 : index
    %c0_6 = arith.constant 0 : index
    %5 = vector.load %arg4[%c2, %c0_6] : memref<3x128xf32, #tpu.memory_space<vmem>>, vector<1x128xf32>
    %6 = vector.broadcast %3 : vector<1x128xf32> to vector<16x128xf32>
    %7 = arith.addf %2, %6 : vector<16x128xf32>
    %c0_7 = arith.constant 0 : index
    %c0_8 = arith.constant 0 : index
    %8 = vector.load %arg2[%c0_7, %c0_8] : memref<16x128xbf16, #tpu.memory_space<vmem>>, vector<16x128xbf16>
    %9 = arith.extf %8 : vector<16x128xbf16> to vector<16x128xf32>
    %10 = arith.addf %7, %9 : vector<16x128xf32>
    %cst_9 = arith.constant dense<0.000000e+00> : vector<16xf32>
    %11 = vector.multi_reduction <add>, %10, %cst_9 [1] : vector<16x128xf32> to vector<16xf32>
    %12 = vector.shape_cast %11 : vector<16xf32> to vector<16x1xf32>
    %cst_10 = arith.constant 1.280000e+02 : f32
    %13 = vector.broadcast %cst_10 : f32 to vector<16x1xf32>
    %14 = arith.divf %12, %13 : vector<16x1xf32>
    %15 = vector.broadcast %14 : vector<16x1xf32> to vector<16x128xf32>
    %16 = arith.subf %10, %15 : vector<16x128xf32>
    %17 = arith.mulf %16, %16 : vector<16x128xf32>
    %cst_11 = arith.constant dense<0.000000e+00> : vector<16xf32>
    %18 = vector.multi_reduction <add>, %17, %cst_11 [1] : vector<16x128xf32> to vector<16xf32>
    %19 = vector.shape_cast %18 : vector<16xf32> to vector<16x1xf32>
    %cst_12 = arith.constant 1.280000e+02 : f32
    %20 = vector.broadcast %cst_12 : f32 to vector<16x1xf32>
    %21 = arith.divf %19, %20 : vector<16x1xf32>
    %22 = vector.broadcast %14 : vector<16x1xf32> to vector<16x128xf32>
    %23 = arith.subf %10, %22 : vector<16x128xf32>
    %cst_13 = arith.constant 9.99999996E-13 : f32
    %24 = vector.broadcast %cst_13 : f32 to vector<16x1xf32>
    %25 = arith.addf %21, %24 : vector<16x1xf32>
    %26 = math.rsqrt %25 : vector<16x1xf32>
    %27 = vector.broadcast %26 : vector<16x1xf32> to vector<16x128xf32>
    %28 = arith.mulf %23, %27 : vector<16x128xf32>
    %29 = vector.broadcast %4 : vector<1x128xf32> to vector<16x128xf32>
    %30 = arith.mulf %28, %29 : vector<16x128xf32>
    %31 = vector.broadcast %5 : vector<1x128xf32> to vector<16x128xf32>
    %32 = arith.addf %30, %31 : vector<16x128xf32>
    %33 = arith.truncf %32 : vector<16x128xf32> to vector<16x128xbf16>
    %c0_14 = arith.constant 0 : index
    %c0_15 = arith.constant 0 : index
    %34 = vector.load %arg5[%c0_14, %c0_15] : memref<16x128xbf16, #tpu.memory_space<vmem>>, vector<16x128xbf16>
    tpu.vector_store %arg5[%c0_14, %c0_15], %33 {strides = array<i32>} : memref<16x128xbf16, #tpu.memory_space<vmem>>, vector<16x128xbf16>,
    return
  }
  func.func @transform_0(%arg0: i32) -> (i32, i32) {
    %c0_i32 = arith.constant 0 : i32
    %c0_i32_0 = arith.constant 0 : i32
    return %arg0, %c0_i32 : i32, i32
  }
  func.func @transform_1(%arg0: i32) -> (i32, i32) {
    %c0_i32 = arith.constant 0 : i32
    %c0_i32_0 = arith.constant 0 : i32
    return %arg0, %c0_i32 : i32, i32
  }
  func.func @transform_2(%arg0: i32) -> (i32, i32) {
    %c0_i32 = arith.constant 0 : i32
    %c0_i32_0 = arith.constant 0 : i32
    %c0_i32_1 = arith.constant 0 : i32
    return %c0_i32, %c0_i32_0 : i32, i32
  }
  func.func @transform_3(%arg0: i32) -> (i32, i32) {
    %c0_i32 = arith.constant 0 : i32
    %c0_i32_0 = arith.constant 0 : i32
    %c0_i32_1 = arith.constant 0 : i32
    return %c0_i32, %c0_i32_0 : i32, i32
  }
  func.func @transform_4(%arg0: i32) -> (i32, i32) {
    %c0_i32 = arith.constant 0 : i32
    %c0_i32_0 = arith.constant 0 : i32
    return %arg0, %c0_i32 : i32, i32
  }
}

</mosaic_0001>

<llo_original>
// kernel: tpu_custom_call.1
$region0: #{tpu_custom_call.1}
  #allocation0 [shape = 'u32[]', space=smem, size = 0x4, offset = 0x4, fixed_abs, tag = 'smem constant byte address 0x4 - core index']
  #allocation1 [shape = 'u32[144,128]{1,0:T(1,128)}', space=vmem, size = 0x12000, scoped, tag = 'internal scratch']
  %s0 = inlined_call_operand.hbm [shape: bf16[24,512], index: 0, kind: input, shape index: {}]
  %s1 = inlined_call_operand.hbm [shape: bf16[24,128], index: 1, kind: input, shape index: {}]
  %s2 = inlined_call_operand.hbm [shape: bf16[512,128], index: 2, kind: input, shape index: {}]
  %s3 = inlined_call_operand.vmem [shape: f32[3,128], index: 3, kind: input, shape index: {}]
  %s4 = inlined_call_operand.hbm [shape: bf16[24,128], index: 4, kind: output, shape index: {}]
  %s5 = sld [smem:[#allocation0]]
  $region61: #{tpu_custom_call.1} parent=0
    _
  %s7 = ssub.s32 1, %s5
  %s8 = scalar_select 0, %s7, %s5
  $region1: #{tpu_custom_call.1} parent=0
    #allocation2 [shape = 'u8[32768]{0}', space=vmem, size = 0x8000, scoped, tag = 'input window, operand 0']
    #allocation3 [shape = 's32[2]{0}', space=sflag, size = 0x8, scoped, tag = 'scoped memory for tpu_custom_call.1']
    #allocation4 [shape = 's32[2]{0}', space=sflag, size = 0x8, scoped, tag = 'scoped memory for tpu_custom_call.1']
    #allocation5 [shape = 'u8[8192]{0}', space=vmem, size = 0x2000, scoped, tag = 'input window, operand 1']
    #allocation6 [shape = 's32[2]{0}', space=sflag, size = 0x8, scoped, tag = 'scoped memory for tpu_custom_call.1']
    #allocation7 [shape = 'u8[131072]{0}', space=vmem, size = 0x20000, scoped, tag = 'input window, operand 2, single buffered']
    #allocation8 [shape = 'u8[8192]{0}', space=vmem, size = 0x2000, scoped, tag = 'output window, operand 0']
    %9 = vsyncpa [#allocation3], 0
    %s10 = scalar_lea.sflag [#allocation3], 1
    %11 = vsyncpa %s10, 0
    %12 = vsyncpa [#allocation6], 0
    %s13 = scalar_lea.sflag [#allocation6], 1
    %14 = vsyncpa %s13, 0
    %15 = vsyncpa [#allocation4], 0
    %s16 = scalar_lea.sflag [#allocation4], 1
    %17 = vsyncpa %s16, 0
    loop: start=0, step=1, limit=4
    $region2: #{tpu_custom_call.1} parent=1 // loop_pre_header
      _
    $region3: #{tpu_custom_call.1} parent=1 // loop_header
      %s19 = sphi 0, %s23
      %p20 = scmp.ge.s32.totalorder %s19, 4
      %s29 = sphi 0, %s31
      %s32 = sphi 0, %s29
      %s33 = sphi 0, %s32
      %s49 = sphi 0, %s33
      %s55 = sphi 0, %s57
      %s58 = sphi 0, %s55
      %s59 = sphi 0, %s58
      %s75 = sphi 0, %s59
      %s79 = sphi 0, %s79
      %s81 = sphi 0, %s79
      %s82 = sphi 0, %s81
      %s96 = sphi 0, %s82
      %s100 = sphi 0, %s100
      %s102 = sphi 0, %s100
      %s103 = sphi 0, %s102
      %s117 = sphi 0, %s103
      %s123 = sphi 0, %s125
      %s126 = sphi 0, %s123
      %s127 = sphi 0, %s126
      %s143 = sphi 0, %s127
    $region4: #{tpu_custom_call.1} parent=1 // loop_header_branch
      %22 = sbr.rel (%p20) target = $region8
    $region5: #{tpu_custom_call.1} parent=1 // loop_body
      %s24 = ssub.s32 %s19, 1
      %s25 = ssub.s32 %s19, 2
      %s26 = sadd.s32 %s19, 1
      %s27 = ssub.s32 %s19, %s26
      %p28 = scmp.eq.s32.totalorder %s27, 0
      %s30 = sadd.s32 %s29, 1
      %s31 = scalar_select %p28, %s29, %s30
      %p34 = pneg %p28
      %p35 = scmp.eq.s32.totalorder %s19, 1
      %p36 = por %p34, %p35
      %p37 = scmp.ne.s32.totalorder %s29, %s32
      %p38 = scmp.eq.s32.totalorder %s19, 0
      %p39 = por %p37, %p38
      %p40 = scmp.ne.s32.totalorder %s29, %s32
      %p41 = scmp.eq.s32.totalorder %s24, 1
      %p42 = por %p40, %p41
      %p43 = scmp.ne.s32.totalorder %s32, %s33
      %p44 = scmp.eq.s32.totalorder %s24, 0
      %p45 = por %p43, %p44
      %p46 = scmp.ne.s32.totalorder %s32, %s33
      %p47 = scmp.eq.s32.totalorder %s25, 1
      %p48 = por %p46, %p47
      %p50 = scmp.ne.s32.totalorder %s33, %s49
      %p51 = scmp.eq.s32.totalorder %s25, 0
      %p52 = por %p50, %p51
      %s53 = ssub.s32 %s19, %s26
      %p54 = scmp.eq.s32.totalorder %s53, 0
      %s56 = sadd.s32 %s55, 1
      %s57 = scalar_select %p54, %s55, %s56
      %p60 = pneg %p54
      %p61 = scmp.eq.s32.totalorder %s19, 1
      %p62 = por %p60, %p61
      %p63 = scmp.ne.s32.totalorder %s55, %s58
      %p64 = scmp.eq.s32.totalorder %s19, 0
      %p65 = por %p63, %p64
      %p66 = scmp.ne.s32.totalorder %s55, %s58
      %p67 = scmp.eq.s32.totalorder %s24, 1
      %p68 = por %p66, %p67
      %p69 = scmp.ne.s32.totalorder %s58, %s59
      %p70 = scmp.eq.s32.totalorder %s24, 0
      %p71 = por %p69, %p70
      %p72 = scmp.ne.s32.totalorder %s58, %s59
      %p73 = scmp.eq.s32.totalorder %s25, 1
      %p74 = por %p72, %p73
      %p76 = scmp.ne.s32.totalorder %s59, %s75
      %p77 = scmp.eq.s32.totalorder %s25, 0
      %p78 = por %p76, %p77
      %s80 = sadd.s32 %s79, 1
      %p83 = scmp.eq.s32.totalorder %s19, 1
      %p84 = scmp.ne.s32.totalorder %s79, %s81
      %p85 = scmp.eq.s32.totalorder %s19, 0
      %p86 = por %p84, %p85
      %p87 = scmp.ne.s32.totalorder %s79, %s81
      %p88 = scmp.eq.s32.totalorder %s24, 1
      %p89 = por %p87, %p88
      %p90 = scmp.ne.s32.totalorder %s81, %s82
      %p91 = scmp.eq.s32.totalorder %s24, 0
      %p92 = por %p90, %p91
      %p93 = scmp.ne.s32.totalorder %s81, %s82
      %p94 = scmp.eq.s32.totalorder %s25, 1
      %p95 = por %p93, %p94
      %p97 = scmp.ne.s32.totalorder %s82, %s96
      %p98 = scmp.eq.s32.totalorder %s25, 0
      %p99 = por %p97, %p98
      %s101 = sadd.s32 %s100, 1
      %p104 = scmp.eq.s32.totalorder %s19, 1
      %p105 = scmp.ne.s32.totalorder %s100, %s102
      %p106 = scmp.eq.s32.totalorder %s19, 0
      %p107 = por %p105, %p106
      %p108 = scmp.ne.s32.totalorder %s100, %s102
      %p109 = scmp.eq.s32.totalorder %s24, 1
      %p110 = por %p108, %p109
      %p111 = scmp.ne.s32.totalorder %s102, %s103
      %p112 = scmp.eq.s32.totalorder %s24, 0
      %p113 = por %p111, %p112
      %p114 = scmp.ne.s32.totalorder %s102, %s103
      %p115 = scmp.eq.s32.totalorder %s25, 1
      %p116 = por %p114, %p115
      %p118 = scmp.ne.s32.totalorder %s103, %s117
      %p119 = scmp.eq.s32.totalorder %s25, 0
      %p120 = por %p118, %p119
      %s121 = ssub.s32 %s19, %s26
      %p122 = scmp.eq.s32.totalorder %s121, 0
      %s124 = sadd.s32 %s123, 1
      %s125 = scalar_select %p122, %s123, %s124
      %p128 = pneg %p122
      %p129 = scmp.eq.s32.totalorder %s19, 1
      %p130 = por %p128, %p129
      %p131 = scmp.ne.s32.totalorder %s123, %s126
      %p132 = scmp.eq.s32.totalorder %s19, 0
      %p133 = por %p131, %p132
      %p134 = scmp.ne.s32.totalorder %s123, %s126
      %p135 = scmp.eq.s32.totalorder %s24, 1
      %p136 = por %p134, %p135
      %p137 = scmp.ne.s32.totalorder %s126, %s127
      %p138 = scmp.eq.s32.totalorder %s24, 0
      %p139 = por %p137, %p138
      %p140 = scmp.ne.s32.totalorder %s126, %s127
      %p141 = scmp.eq.s32.totalorder %s25, 1
      %p142 = por %p140, %p141
      %p144 = scmp.ne.s32.totalorder %s127, %s143
      %p145 = scmp.eq.s32.totalorder %s25, 0
      %p146 = por %p144, %p145
      %p147 = scmp.le.s32.totalorder 1, %s19
      %p148 = scmp.lt.s32.totalorder %s19, 3
      %p149 = pnand %p147, %p148
      %p150 = pneg %p149
      // Predicated region
      $region9: #{tpu_custom_call.1} parent=5 // pred_check
        _
      $region10: #{tpu_custom_call.1} parent=5 // pred_check_branch
        %152 = sbr.rel (%p149) target = $region12
      $region11: #{tpu_custom_call.1} parent=5 // pred_region
        %s153 = ssub.s32 %s19, 1
        // Predicated region
        $region13: #{tpu_custom_call.1} parent=11 // pred_check
          %p154 = pneg %p92
        $region14: #{tpu_custom_call.1} parent=11 // pred_check_branch
          %156 = sbr.rel (%p154) target = $region16
        $region15: #{tpu_custom_call.1} parent=11 // pred_region
          %s158 = ssub.s32 4096, 4096
          %159 = vsyncadd [#allocation6], %s158
          %s160 = sshll.u32 [#allocation7], 4
          %s161 = int_to_ptr.vmem [resolvable:$true] %s160
          %166 = dma.hbm_to_vmem [thread:$0]  %s2, 4096, %s161, [#allocation6], 64, 64, 4
        $region16: #{tpu_custom_call.1} parent=11 // pred_fallthru
          _
        // Predicated region
        $region17: #{tpu_custom_call.1} parent=11 // pred_check
          %p167 = pneg %p113
        $region18: #{tpu_custom_call.1} parent=11 // pred_check_branch
          %169 = sbr.rel (%p167) target = $region20
        $region19: #{tpu_custom_call.1} parent=11 // pred_region
          _
        $region20: #{tpu_custom_call.1} parent=11 // pred_fallthru
          _
      $region12: #{tpu_custom_call.1} parent=5 // pred_fallthru
        _
      %p170 = scmp.lt.s32.totalorder %s19, 2
      // Predicated region
      $region21: #{tpu_custom_call.1} parent=5 // pred_check
        %p171 = pneg %p170
      $region22: #{tpu_custom_call.1} parent=5 // pred_check_branch
        %173 = sbr.rel (%p171) target = $region24
      $region23: #{tpu_custom_call.1} parent=5 // pred_region
        // Predicated region
        $region25: #{tpu_custom_call.1} parent=23 // pred_check
          %p174 = pneg %p39
        $region26: #{tpu_custom_call.1} parent=23 // pred_check_branch
          %176 = sbr.rel (%p174) target = $region28
        $region27: #{tpu_custom_call.1} parent=23 // pred_region
          %s177 = sand.u32 %s29, 1
          %s178 = scalar_lea.sflag [#allocation3], %s177
          %s179 = sand.u32 %s29, 1
          %s180 = smul.addr %s179, 32
          %s181 = scalar_lea.vmem [#allocation2], %s180
          %s182 = smul.u32 2, %s19
          %s183 = ssub.s32 3, %s182
          %p184 = scmp.lt.s32.totalorder %s183, 2
          %s185 = scalar_select %p184, %s183, 2
          %s186 = smul.u32 64, %s185
          %s187 = smul.u32 %s186, 4
          %s189 = ssub.s32 512, %s187
          %190 = vsyncadd %s178, %s189
          %p191 = scmp.ne.s32.totalorder 0, %s187
          %s192 = smul.addr %s182, 4
          %s193 = smul.addr %s192, 64
          %s194 = scalar_lea.hbm %s0, %s193
          %s195 = smul.u32 16, %s185
          %s196 = sshll.u32 %s181, 4
          %s197 = int_to_ptr.vmem [resolvable:$true] %s196
          %s198 = sshll.u32 %s195, 4
          %202 = dma.hbm_to_vmem [thread:$0]  (%p191), %s194, %s198, %s197, %s178, 256, 256, 16
        $region28: #{tpu_custom_call.1} parent=23 // pred_fallthru
          _
        // Predicated region
        $region29: #{tpu_custom_call.1} parent=23 // pred_check
          %p203 = pneg %p65
        $region30: #{tpu_custom_call.1} parent=23 // pred_check_branch
          %205 = sbr.rel (%p203) target = $region32
        $region31: #{tpu_custom_call.1} parent=23 // pred_region
          %s206 = sand.u32 %s19, 1
          %s207 = scalar_lea.sflag [#allocation6], %s206
          %s208 = sand.u32 %s55, 1
          %s209 = smul.addr %s208, 8
          %s210 = scalar_lea.vmem [#allocation5], %s209
          %s211 = smul.u32 2, %s19
          %s212 = ssub.s32 3, %s211
          %p213 = scmp.lt.s32.totalorder %s212, 2
          %s214 = scalar_select %p213, %s212, 2
          %s215 = smul.u32 64, %s214
          %s217 = ssub.s32 128, %s215
          %218 = vsyncadd %s207, %s217
          %p219 = scmp.ne.s32.totalorder 0, %s215
          %s220 = smul.addr %s211, 64
          %s221 = scalar_lea.hbm %s1, %s220
          %s222 = smul.u32 4, %s214
          %s223 = sshll.u32 %s210, 4
          %s224 = int_to_ptr.vmem [resolvable:$true] %s223
          %s225 = sshll.u32 %s222, 4
          %229 = dma.hbm_to_vmem [thread:$0]  (%p219), %s221, %s225, %s224, %s207, 64, 64, 4
        $region32: #{tpu_custom_call.1} parent=23 // pred_fallthru
          _
      $region24: #{tpu_custom_call.1} parent=5 // pred_fallthru
        _
      %p230 = scmp.le.s32.totalorder 1, %s19
      %p231 = scmp.lt.s32.totalorder %s19, 3
      %p232 = pnand %p230, %p231
      %p233 = pneg %p232
      // Predicated region
      $region33: #{tpu_custom_call.1} parent=5 // pred_check
        _
      $region34: #{tpu_custom_call.1} parent=5 // pred_check_branch
        %235 = sbr.rel (%p232) target = $region36
      $region35: #{tpu_custom_call.1} parent=5 // pred_region
        %s236 = ssub.s32 %s19, 1
        %s237 = sand.u32 %s32, 1
        %s238 = scalar_lea.sflag [#allocation3], %s237
        %s239 = sand.u32 %s32, 1
        %s240 = smul.addr %s239, 32
        %s241 = scalar_lea.vmem [#allocation2], %s240
        // Predicated region
        $region37: #{tpu_custom_call.1} parent=35 // pred_check
          %p242 = pneg %p45
        $region38: #{tpu_custom_call.1} parent=35 // pred_check_branch
          %244 = sbr.rel (%p242) target = $region40
        $region39: #{tpu_custom_call.1} parent=35 // pred_region
          %245 = dma.done %s238, 512
        $region40: #{tpu_custom_call.1} parent=35 // pred_fallthru
          _
        %s246 = sand.u32 %s24, 1
        %s247 = scalar_lea.sflag [#allocation6], %s246
        %s248 = sand.u32 %s58, 1
        %s249 = smul.addr %s248, 8
        %s250 = scalar_lea.vmem [#allocation5], %s249
        // Predicated region
        $region41: #{tpu_custom_call.1} parent=35 // pred_check
          %p251 = pneg %p71
        $region42: #{tpu_custom_call.1} parent=35 // pred_check_branch
          %253 = sbr.rel (%p251) target = $region44
        $region43: #{tpu_custom_call.1} parent=35 // pred_region
          %254 = dma.done %s247, 128
        $region44: #{tpu_custom_call.1} parent=35 // pred_fallthru
          _
        // Predicated region
        $region45: #{tpu_custom_call.1} parent=35 // pred_check
          %p255 = pneg %p92
        $region46: #{tpu_custom_call.1} parent=35 // pred_check_branch
          %257 = sbr.rel (%p255) target = $region48
        $region47: #{tpu_custom_call.1} parent=35 // pred_region
          %258 = dma.done [#allocation6], 4096
        $region48: #{tpu_custom_call.1} parent=35 // pred_fallthru
          _
        %s259 = sand.u32 %s32, 1
        %s260 = scalar_lea.sflag [#allocation3], %s259
        %s261 = sand.u32 %s32, 1
        %s262 = smul.addr %s261, 32
        %s263 = scalar_lea.vmem [#allocation2], %s262
        %p264 = pneg %p45
        %p265 = pneg %p42
        %s266 = sand.u32 %s24, 1
        %s267 = scalar_lea.sflag [#allocation6], %s266
        %s268 = sand.u32 %s58, 1
        %s269 = smul.addr %s268, 8
        %s270 = scalar_lea.vmem [#allocation5], %s269
        %p271 = pneg %p71
        %p272 = pneg %p68
        %p273 = pneg %p92
        %p274 = pneg %p89
        %p275 = pneg %p113
        %p276 = pneg %p110
        %p277 = pneg %p139
        %p278 = pneg %p136
        %s279 = sand.u32 %s126, 1
        %s280 = scalar_lea.sflag [#allocation4], %s279
        %s281 = sand.u32 %s126, 1
        %s282 = smul.addr %s281, 8
        %s283 = scalar_lea.vmem [#allocation8], %s282
        %s284 = smul.u32 2, %s24
        %s285 = ssub.s32 3, %s284
        %p286 = scmp.lt.s32.totalorder %s285, 2
        %s287 = scalar_select %p286, %s285, 2
        %s288 = smul.u32 64, %s287
        %s289 = smul.u32 %s288, 4
        %s290 = smul.u32 2, %s24
        %s291 = ssub.s32 3, %s290
        %p292 = scmp.lt.s32.totalorder %s291, 2
        %s293 = scalar_select %p292, %s291, 2
        %s294 = smul.u32 64, %s293
        %s295 = smul.u32 2, %s24
        %s296 = ssub.s32 3, %s295
        %p297 = scmp.lt.s32.totalorder %s296, 2
        %s298 = scalar_select %p297, %s296, 2
        %s299 = smul.u32 64, %s298
        %v301 = vld [vmem:[%s241] sm:$0xff]
        %v302 = vld [vmem:[%s241 + $0x8] sm:$0xff]
        %v303 = vld [vmem:[%s241 + $0x10] sm:$0xff]
        %v304 = vld [vmem:[%s241 + $0x18] sm:$0xff]
        %v305 = vld [vmem:[#allocation7] sm:$0xf]
        %v306 = vld [vmem:[#allocation7 + $0x4] sm:$0xf]
        %v307 = vld [vmem:[#allocation7 + $0x8] sm:$0xf]
        %v308 = vld [vmem:[#allocation7 + $0xc] sm:$0xf]
        %v309 = vld [vmem:[#allocation7 + $0x10] sm:$0xf]
        %v310 = vld [vmem:[#allocation7 + $0x14] sm:$0xf]
        %v311 = vld [vmem:[#allocation7 + $0x18] sm:$0xf]
        %v312 = vld [vmem:[#allocation7 + $0x1c] sm:$0xf]
        %v313 = vld [vmem:[#allocation7 + $0x20] sm:$0xf]
        %v314 = vld [vmem:[#allocation7 + $0x24] sm:$0xf]
        %v315 = vld [vmem:[#allocation7 + $0x28] sm:$0xf]
        %v316 = vld [vmem:[#allocation7 + $0x2c] sm:$0xf]
        %v317 = vld [vmem:[#allocation7 + $0x30] sm:$0xf]
        %v318 = vld [vmem:[#allocation7 + $0x34] sm:$0xf]
        %v319 = vld [vmem:[#allocation7 + $0x38] sm:$0xf]
        %v320 = vld [vmem:[#allocation7 + $0x3c] sm:$0xf]
        %v321 = vld [vmem:[#allocation7 + $0x40] sm:$0xf]
        %v322 = vld [vmem:[#allocation7 + $0x44] sm:$0xf]
        %v323 = vld [vmem:[#allocation7 + $0x48] sm:$0xf]
        %v324 = vld [vmem:[#allocation7 + $0x4c] sm:$0xf]
        %v325 = vld [vmem:[#allocation7 + $0x50] sm:$0xf]
        %v326 = vld [vmem:[#allocation7 + $0x54] sm:$0xf]
        %v327 = vld [vmem:[#allocation7 + $0x58] sm:$0xf]
        %v328 = vld [vmem:[#allocation7 + $0x5c] sm:$0xf]
        %v329 = vld [vmem:[#allocation7 + $0x60] sm:$0xf]
        %v330 = vld [vmem:[#allocation7 + $0x64] sm:$0xf]
        %v331 = vld [vmem:[#allocation7 + $0x68] sm:$0xf]
        %v332 = vld [vmem:[#allocation7 + $0x6c] sm:$0xf]
        %v333 = vld [vmem:[#allocation7 + $0x70] sm:$0xf]
        %v334 = vld [vmem:[#allocation7 + $0x74] sm:$0xf]
        %v335 = vld [vmem:[#allocation7 + $0x78] sm:$0xf]
        %v336 = vld [vmem:[#allocation7 + $0x7c] sm:$0xf]
        %v337 = vld [vmem:[#allocation7 + $0x80] sm:$0xf]
        %v338 = vld [vmem:[#allocation7 + $0x84] sm:$0xf]
        %v339 = vld [vmem:[#allocation7 + $0x88] sm:$0xf]
        %v340 = vld [vmem:[#allocation7 + $0x8c] sm:$0xf]
        %v341 = vld [vmem:[#allocation7 + $0x90] sm:$0xf]
        %v342 = vld [vmem:[#allocation7 + $0x94] sm:$0xf]
        %v343 = vld [vmem:[#allocation7 + $0x98] sm:$0xf]
        %v344 = vld [vmem:[#allocation7 + $0x9c] sm:$0xf]
        %v345 = vld [vmem:[#allocation7 + $0xa0] sm:$0xf]
        %v346 = vld [vmem:[#allocation7 + $0xa4] sm:$0xf]
        %v347 = vld [vmem:[#allocation7 + $0xa8] sm:$0xf]
        %v348 = vld [vmem:[#allocation7 + $0xac] sm:$0xf]
        %v349 = vld [vmem:[#allocation7 + $0xb0] sm:$0xf]
        %v350 = vld [vmem:[#allocation7 + $0xb4] sm:$0xf]
        %v351 = vld [vmem:[#allocation7 + $0xb8] sm:$0xf]
        %v352 = vld [vmem:[#allocation7 + $0xbc] sm:$0xf]
        %v353 = vld [vmem:[#allocation7 + $0xc0] sm:$0xf]
        %v354 = vld [vmem:[#allocation7 + $0xc4] sm:$0xf]
        %v355 = vld [vmem:[#allocation7 + $0xc8] sm:$0xf]
        %v356 = vld [vmem:[#allocation7 + $0xcc] sm:$0xf]
        %v357 = vld [vmem:[#allocation7 + $0xd0] sm:$0xf]
        %v358 = vld [vmem:[#allocation7 + $0xd4] sm:$0xf]
        %v359 = vld [vmem:[#allocation7 + $0xd8] sm:$0xf]
        %v360 = vld [vmem:[#allocation7 + $0xdc] sm:$0xf]
        %v361 = vld [vmem:[#allocation7 + $0xe0] sm:$0xf]
        %v362 = vld [vmem:[#allocation7 + $0xe4] sm:$0xf]
        %v363 = vld [vmem:[#allocation7 + $0xe8] sm:$0xf]
        %v364 = vld [vmem:[#allocation7 + $0xec] sm:$0xf]
        %v365 = vld [vmem:[#allocation7 + $0xf0] sm:$0xf]
        %v366 = vld [vmem:[#allocation7 + $0xf4] sm:$0xf]
        %v367 = vld [vmem:[#allocation7 + $0xf8] sm:$0xf]
        %v368 = vld [vmem:[#allocation7 + $0xfc] sm:$0xf]
        %v369 = vld [vmem:[%s3] sm:$0x1]
        %v370 = vld [vmem:[%s3 + $0x1] sm:$0x1]
        %v371 = vld [vmem:[%s3 + $0x2] sm:$0x1]
        %v372 = vlaneseq
        %v373 = vshrl.u32 %v372, 7
        %v374 = vsub.s32 0, %v373
        %v375 = vrot.slane %v369, %v374
        %v380 = vunpack.c.l.b16 %v301
        %v381 = vunpack.c.h.b16 %v301
        %v382 = vunpack.c.l.b16 %v302
        %v383 = vunpack.c.h.b16 %v302
        %v384 = vunpack.c.l.b16 %v303
        %v385 = vunpack.c.h.b16 %v303
        %v386 = vunpack.c.l.b16 %v304
        %v387 = vunpack.c.h.b16 %v304
        %v388 = vpack.c.b16 %v384, %v380
        %v389 = vpack.c.b16 %v385, %v381
        %v390 = vpack.c.b16 %v386, %v382
        %v391 = vpack.c.b16 %v387, %v383
        %v460 = vunpack.c.l.b16 %v305
        %v461 = vunpack.c.l.b16 %v306
        %v462 = vunpack.c.l.b16 %v307
        %v463 = vunpack.c.l.b16 %v308
        %v464 = vunpack.c.l.b16 %v309
        %v465 = vunpack.c.l.b16 %v310
        %v466 = vunpack.c.l.b16 %v311
        %v467 = vunpack.c.l.b16 %v312
        %v468 = vunpack.c.l.b16 %v313
        %v469 = vunpack.c.l.b16 %v314
        %v470 = vunpack.c.l.b16 %v315
        %v471 = vunpack.c.l.b16 %v316
        %v472 = vunpack.c.l.b16 %v317
        %v473 = vunpack.c.l.b16 %v318
        %v474 = vunpack.c.l.b16 %v319
        %v475 = vunpack.c.l.b16 %v320
        %v476 = vunpack.c.l.b16 %v321
        %v477 = vunpack.c.l.b16 %v322
        %v478 = vunpack.c.l.b16 %v323
        %v479 = vunpack.c.l.b16 %v324
        %v480 = vunpack.c.l.b16 %v325
        %v481 = vunpack.c.l.b16 %v326
        %v482 = vunpack.c.l.b16 %v327
        %v483 = vunpack.c.l.b16 %v328
        %v484 = vunpack.c.l.b16 %v329
        %v485 = vunpack.c.l.b16 %v330
        %v486 = vunpack.c.l.b16 %v331
        %v487 = vunpack.c.l.b16 %v332
        %v488 = vunpack.c.l.b16 %v333
        %v489 = vunpack.c.l.b16 %v334
        %v490 = vunpack.c.l.b16 %v335
        %v491 = vunpack.c.l.b16 %v336
        %v492 = vunpack.c.l.b16 %v337
        %v493 = vunpack.c.l.b16 %v338
        %v494 = vunpack.c.l.b16 %v339
        %v495 = vunpack.c.l.b16 %v340
        %v496 = vunpack.c.l.b16 %v341
        %v497 = vunpack.c.l.b16 %v342
        %v498 = vunpack.c.l.b16 %v343
        %v499 = vunpack.c.l.b16 %v344
        %v500 = vunpack.c.l.b16 %v345
        %v501 = vunpack.c.l.b16 %v346
        %v502 = vunpack.c.l.b16 %v347
        %v503 = vunpack.c.l.b16 %v348
        %v504 = vunpack.c.l.b16 %v349
        %v505 = vunpack.c.l.b16 %v350
        %v506 = vunpack.c.l.b16 %v351
        %v507 = vunpack.c.l.b16 %v352
        %v508 = vunpack.c.l.b16 %v353
        %v509 = vunpack.c.l.b16 %v354
        %v510 = vunpack.c.l.b16 %v355
        %v511 = vunpack.c.l.b16 %v356
        %v512 = vunpack.c.l.b16 %v357
        %v513 = vunpack.c.l.b16 %v358
        %v514 = vunpack.c.l.b16 %v359
        %v515 = vunpack.c.l.b16 %v360
        %v516 = vunpack.c.l.b16 %v361
        %v517 = vunpack.c.l.b16 %v362
        %v518 = vunpack.c.l.b16 %v363
        %v519 = vunpack.c.l.b16 %v364
        %v520 = vunpack.c.l.b16 %v365
        %v521 = vunpack.c.l.b16 %v366
        %v522 = vunpack.c.l.b16 %v367
        %v523 = vunpack.c.l.b16 %v368
        %v524 = vpack.c.b16 %v461, %v460
        %v525 = vpack.c.b16 %v463, %v462
        %v526 = vpack.c.b16 %v465, %v464
        %v527 = vpack.c.b16 %v467, %v466
        %v528 = vpack.c.b16 %v469, %v468
        %v529 = vpack.c.b16 %v471, %v470
        %v530 = vpack.c.b16 %v473, %v472
        %v531 = vpack.c.b16 %v475, %v474
        %v532 = vpack.c.b16 %v477, %v476
        %v533 = vpack.c.b16 %v479, %v478
        %v534 = vpack.c.b16 %v481, %v480
        %v535 = vpack.c.b16 %v483, %v482
        %v536 = vpack.c.b16 %v485, %v484
        %v537 = vpack.c.b16 %v487, %v486
        %v538 = vpack.c.b16 %v489, %v488
        %v539 = vpack.c.b16 %v491, %v490
        %v540 = vpack.c.b16 %v493, %v492
        %v541 = vpack.c.b16 %v495, %v494
        %v542 = vpack.c.b16 %v497, %v496
        %v543 = vpack.c.b16 %v499, %v498
        %v544 = vpack.c.b16 %v501, %v500
        %v545 = vpack.c.b16 %v503, %v502
        %v546 = vpack.c.b16 %v505, %v504
        %v547 = vpack.c.b16 %v507, %v506
        %v548 = vpack.c.b16 %v509, %v508
        %v549 = vpack.c.b16 %v511, %v510
        %v550 = vpack.c.b16 %v513, %v512
        %v551 = vpack.c.b16 %v515, %v514
        %v552 = vpack.c.b16 %v517, %v516
        %v553 = vpack.c.b16 %v519, %v518
        %v554 = vpack.c.b16 %v521, %v520
        %v555 = vpack.c.b16 %v523, %v522
        %588 = vmatprep.subr.bf16.mxu0 0
        %589 = vmatpush1.bf16.msra.mxu0 %v524
        %590 = vmatprep.subr.bf16.mxu0 0
        %591 = vmatpush1.bf16.msra.mxu0 %v525
        %592 = vmatprep.subr.bf16.mxu0 0
        %593 = vmatpush1.bf16.msra.mxu0 %v526
        %594 = vmatprep.subr.bf16.mxu0 0
        %595 = vmatpush1.bf16.msra.mxu0 %v527
        %596 = vmatprep.subr.bf16.mxu0 0
        %597 = vmatpush1.bf16.msra.mxu0 %v528
        %598 = vmatprep.subr.bf16.mxu0 0
        %599 = vmatpush1.bf16.msra.mxu0 %v529
        %600 = vmatprep.subr.bf16.mxu0 0
        %601 = vmatpush1.bf16.msra.mxu0 %v530
        %602 = vmatprep.subr.bf16.mxu0 0
        %603 = vmatpush1.bf16.msra.mxu0 %v531
        %604 = vmatprep.subr.bf16.mxu0 0
        %605 = vmatpush1.bf16.msra.mxu0 %v532
        %606 = vmatprep.subr.bf16.mxu0 0
        %607 = vmatpush1.bf16.msra.mxu0 %v533
        %608 = vmatprep.subr.bf16.mxu0 0
        %609 = vmatpush1.bf16.msra.mxu0 %v534
        %610 = vmatprep.subr.bf16.mxu0 0
        %611 = vmatpush1.bf16.msra.mxu0 %v535
        %612 = vmatprep.subr.bf16.mxu0 0
        %613 = vmatpush1.bf16.msra.mxu0 %v536
        %614 = vmatprep.subr.bf16.mxu0 0
        %615 = vmatpush1.bf16.msra.mxu0 %v537
        %616 = vmatprep.subr.bf16.mxu0 0
        %617 = vmatpush1.bf16.msra.mxu0 %v538
        %618 = vmatprep.subr.bf16.mxu0 0
        %619 = vmatpush1.bf16.msra.mxu0 %v539
        %620 = vmatprep.mubr.bf16.mxu0 %v389
        %621 = vmatmul.mubr.bf16.gmra.mrb[0].mxu0 %v388
        %v622 = vpop.f32.mrb[0].mxu0
        %v623 = vadd.f32 %v375, %v622
        %v624 = vpop.f32.mrb[0].mxu0
        %v625 = vpop.f32.mrb[0].mxu0
        %v626 = vadd.f32 %v375, %v625
        %v627 = vpop.f32.mrb[0].mxu0
        %628 = vdwg.mxu0
        %629 = vmatprep.subr.bf16.mxu0 0
        %630 = vmatpush1.bf16.msra.mxu0 %v540
        %631 = vmatprep.subr.bf16.mxu0 0
        %632 = vmatpush1.bf16.msra.mxu0 %v541
        %633 = vmatprep.subr.bf16.mxu0 0
        %634 = vmatpush1.bf16.msra.mxu0 %v542
        %635 = vmatprep.subr.bf16.mxu0 0
        %636 = vmatpush1.bf16.msra.mxu0 %v543
        %637 = vmatprep.subr.bf16.mxu0 0
        %638 = vmatpush1.bf16.msra.mxu0 %v544
        %639 = vmatprep.subr.bf16.mxu0 0
        %640 = vmatpush1.bf16.msra.mxu0 %v545
        %641 = vmatprep.subr.bf16.mxu0 0
        %642 = vmatpush1.bf16.msra.mxu0 %v546
        %643 = vmatprep.subr.bf16.mxu0 0
        %644 = vmatpush1.bf16.msra.mxu0 %v547
        %645 = vmatprep.subr.bf16.mxu0 0
        %646 = vmatpush1.bf16.msra.mxu0 %v548
        %647 = vmatprep.subr.bf16.mxu0 0
        %648 = vmatpush1.bf16.msra.mxu0 %v549
        %649 = vmatprep.subr.bf16.mxu0 0
        %650 = vmatpush1.bf16.msra.mxu0 %v550
        %651 = vmatprep.subr.bf16.mxu0 0
        %652 = vmatpush1.bf16.msra.mxu0 %v551
        %653 = vmatprep.subr.bf16.mxu0 0
        %654 = vmatpush1.bf16.msra.mxu0 %v552
        %655 = vmatprep.subr.bf16.mxu0 0
        %656 = vmatpush1.bf16.msra.mxu0 %v553
        %657 = vmatprep.subr.bf16.mxu0 0
        %658 = vmatpush1.bf16.msra.mxu0 %v554
        %659 = vmatprep.subr.bf16.mxu0 0
        %660 = vmatpush1.bf16.msra.mxu0 %v555
        %661 = vmatprep.mubr.bf16.mxu0 %v391
        %662 = vmatmul.mubr.bf16.gmra.mrb[0].mxu0 %v390
        %v663 = vpop.f32.mrb[0].mxu0
        %v664 = vadd.f32 %v623, %v663
        %v665 = vpop.f32.mrb[0].mxu0
        %v666 = vpop.f32.mrb[0].mxu0
        %v667 = vadd.f32 %v626, %v666
        %v668 = vpop.f32.mrb[0].mxu0
        %669 = vdwg.mxu0
        %v670 = vld [vmem:[%s250] sm:$0xf]
        %v671 = vld [vmem:[%s250 + $0x4] sm:$0xf]
        %v672 = vunpack.c.l.bf16 %v670
        %v673 = vunpack.c.l.bf16 %v671
        %v674 = vadd.f32 %v664, %v672
        %v675 = vadd.f32 %v667, %v673
        %676 = vadd.xlane.f32.xlu0 %v674
        %v677 = vpop.xlane.xlu0 %676
        %678 = vadd.xlane.f32.xlu0 %v675
        %v679 = vpop.xlane.xlu0 %678
        %v680 = vrcp.pop 128.0
        %v681 = vmul.f32 %v677, %v680
        %v682 = vmul.f32 %v679, %v680
        %v683 = vsub.f32 %v674, %v681
        %v684 = vsub.f32 %v675, %v682
        %v685 = vmul.f32 %v683, %v683
        %v686 = vmul.f32 %v684, %v684
        %687 = vadd.xlane.f32.xlu0 %v685
        %v688 = vpop.xlane.xlu0 %687
        %689 = vadd.xlane.f32.xlu0 %v686
        %v690 = vpop.xlane.xlu0 %689
        %v691 = vmul.f32 %v688, %v680
        %v692 = vmul.f32 %v690, %v680
        %v693 = vadd.f32 %v691, 1e-12
        %v694 = vadd.f32 %v692, 1e-12
        %v695 = vrsqrt.pop %v693
        %v696 = vrsqrt.pop %v694
        %v697 = vmul.f32 %v683, %v695
        %v698 = vmul.f32 %v684, %v696
        %v699 = vlaneseq
        %v700 = vshrl.u32 %v699, 7
        %v701 = vsub.s32 0, %v700
        %v702 = vrot.slane %v370, %v701
        %v703 = vmul.f32 %v697, %v702
        %v704 = vmul.f32 %v698, %v702
        %v705 = vlaneseq
        %v706 = vshrl.u32 %v705, 7
        %v707 = vsub.s32 0, %v706
        %v708 = vrot.slane %v371, %v707
        %v709 = vadd.f32 %v703, %v708
        %v710 = vadd.f32 %v704, %v708
        %v711 = vpack.c.bf16 %v710, %v709
        %v713 = vunpack.c.l.b16 %v711
        %v714 = vunpack.c.h.b16 %v711
        %v715 = vpack.c.b16 %v713, %v713
        %v716 = vpack.c.b16 %v714, %v714
        %719 = vst [vmem:[%s283] sm:$0xf] %v715
        %720 = vst [vmem:[%s283 + $0x4] sm:$0xf] %v716
        %s721 = sand.u32 %s126, 1
        %s722 = scalar_lea.sflag [#allocation4], %s721
        %s723 = sand.u32 %s126, 1
        %s724 = smul.addr %s723, 8
        %s725 = scalar_lea.vmem [#allocation8], %s724
        // Predicated region
        $region49: #{tpu_custom_call.1} parent=35 // pred_check
          %p726 = pneg %p136
        $region50: #{tpu_custom_call.1} parent=35 // pred_check_branch
          %728 = sbr.rel (%p726) target = $region52
        $region51: #{tpu_custom_call.1} parent=35 // pred_region
          %s729 = smul.u32 2, %s24
          %s730 = ssub.s32 3, %s729
          %p731 = scmp.lt.s32.totalorder %s730, 2
          %s732 = scalar_select %p731, %s730, 2
          %s733 = smul.u32 64, %s732
          %s735 = ssub.s32 128, %s733
          %736 = vsyncadd %s722, %s735
          %p737 = scmp.ne.s32.totalorder 0, %s733
          %s738 = smul.addr %s729, 64
          %s739 = scalar_lea.hbm %s4, %s738
          %s740 = smul.u32 4, %s732
          %s741 = sshll.u32 %s725, 4
          %s742 = int_to_ptr.vmem [resolvable:$true] %s741
          %s743 = sshll.u32 %s740, 4
          %747 = dma.vmem_to_hbm [thread:$0]  (%p737), %s742, %s743, %s739, %s722, 64, 64, 4
        $region52: #{tpu_custom_call.1} parent=35 // pred_fallthru
          _
      $region36: #{tpu_custom_call.1} parent=5 // pred_fallthru
        _
      %p748 = scmp.le.s32.totalorder 2, %s19
      // Predicated region
      $region53: #{tpu_custom_call.1} parent=5 // pred_check
        %p749 = pneg %p748
      $region54: #{tpu_custom_call.1} parent=5 // pred_check_branch
        %751 = sbr.rel (%p749) target = $region56
      $region55: #{tpu_custom_call.1} parent=5 // pred_region
        %s752 = ssub.s32 %s19, 2
        // Predicated region
        $region57: #{tpu_custom_call.1} parent=55 // pred_check
          %p753 = pneg %p142
        $region58: #{tpu_custom_call.1} parent=55 // pred_check_branch
          %755 = sbr.rel (%p753) target = $region60
        $region59: #{tpu_custom_call.1} parent=55 // pred_region
          %s756 = sand.u32 %s127, 1
          %s757 = scalar_lea.sflag [#allocation4], %s756
          %s758 = sand.u32 %s127, 1
          %s759 = smul.addr %s758, 8
          %s760 = scalar_lea.vmem [#allocation8], %s759
          %761 = dma.done %s757, 128
        $region60: #{tpu_custom_call.1} parent=55 // pred_fallthru
          _
      $region56: #{tpu_custom_call.1} parent=5 // pred_fallthru
        _
    $region6: #{tpu_custom_call.1} parent=1 // loop_footer
      %s23 = sadd.s32 1, %s19
    $region7: #{tpu_custom_call.1} parent=1 // loop_footer_branch
      %18 = sbr.rel target = $region3
    $region8: #{tpu_custom_call.1} parent=1 // loop_exit
      _
    %762 = vsyncpa [#allocation3], 1
    %s763 = scalar_lea.sflag [#allocation3], 1
    %764 = vsyncpa %s763, 1
    %765 = vsyncpa [#allocation6], 1
    %s766 = scalar_lea.sflag [#allocation6], 1
    %767 = vsyncpa %s766, 1
    %768 = vsyncpa [#allocation4], 1
    %s769 = scalar_lea.sflag [#allocation4], 1
    %770 = vsyncpa %s769, 1

</llo_original>
